<compile_context>
chip_gen: v7x
topology: tpu7x:2x2x1
jax: 0.10.0
libtpu: 0.0.40
codegen_flags: <defaults>
</compile_context>

<pallas_src>
import jax
import jax.numpy as jnp
from jax.experimental import pallas as pl
from jax.experimental.pallas import tpu as pltpu


def _round_up(x, m):
    return ((x + m - 1) // m) * m


def erm_mlp_kernel(x_ref, w1_ref, b1_ref, w2_ref, b2_ref, w3_ref, b3_ref, out_ref):
    # x arrives as f32; cast to bf16 in-kernel (free VPU filler under the DMA).
    x = x_ref[...].astype(jnp.bfloat16)
    # featurizer layer 1: Linear + ReLU   (bf16 MXU, f32 accumulate)
    h1 = jnp.dot(x, w1_ref[...], preferred_element_type=jnp.float32)
    h1 = jnp.maximum(h1 + b1_ref[...], 0.0).astype(jnp.bfloat16)
    # featurizer layer 2: Linear + ReLU
    h2 = jnp.dot(h1, w2_ref[...], preferred_element_type=jnp.float32)
    h2 = jnp.maximum(h2 + b2_ref[...], 0.0).astype(jnp.bfloat16)
    # classifier: Linear (nonlinear=False) -> padded lane-dense logits
    logits = jnp.dot(h2, w3_ref[...], preferred_element_type=jnp.float32)
    out_ref[...] = (logits + b3_ref[...]).astype(out_ref.dtype)


def prepare_params(params):
    """One-time: pad weights/biases to lane-aligned blocks and cast weights to bf16.

    Call once; the returned dict is reused by every erm_forward call so the hot
    path carries no per-call padding/cast work.
    """
    w1, b1, w2, b2, w3, b3 = params
    d_in, hidden = w1.shape
    n_classes = w3.shape[1]

    DP = _round_up(d_in, 128)       # input feature dim  -> multiple of 128
    HP = _round_up(hidden, 128)     # hidden dim         -> full 128-lane vregs
    CP = _round_up(n_classes, 128)  # lane-dense output slab

    w1p = jnp.zeros((DP, HP), jnp.bfloat16).at[:d_in, :hidden].set(
        w1.astype(jnp.bfloat16))
    b1p = jnp.zeros((1, HP), jnp.float32).at[:, :hidden].set(
        jnp.reshape(b1, (1, hidden)))
    w2p = jnp.zeros((HP, HP), jnp.bfloat16).at[:hidden, :hidden].set(
        w2.astype(jnp.bfloat16))
    b2p = jnp.zeros((1, HP), jnp.float32).at[:, :hidden].set(
        jnp.reshape(b2, (1, hidden)))
    w3p = jnp.zeros((HP, CP), jnp.bfloat16).at[:hidden, :n_classes].set(
        w3.astype(jnp.bfloat16))
    b3p = jnp.zeros((1, CP), jnp.float32).at[:, :n_classes].set(
        jnp.reshape(b3, (1, n_classes)))

    prepared = dict(
        weights=(w1p, b1p, w2p, b2p, w3p, b3p),
        d_in=d_in, hidden=hidden, n_classes=n_classes,
        DP=DP, HP=HP, CP=CP,
    )
    return prepared


def erm_forward(x_nchw, prepared, *, tm=1024):
    """x_nchw: [B, C, H, W] float32. Returns logits [B, n_classes] float32."""
    B = x_nchw.shape[0]
    x_flat = x_nchw.reshape(B, -1).astype(jnp.float32)  # flatten, as DomainBed MLP
    d_in = x_flat.shape[1]
    assert d_in == prepared["d_in"], "prepared params do not match input feature dim"

    w1p, b1p, w2p, b2p, w3p, b3p = prepared["weights"]
    DP, HP, CP = prepared["DP"], prepared["HP"], prepared["CP"]
    n_classes = prepared["n_classes"]

    # Only pad features if d_in is not already 128-aligned (it is in the common
    # flattened-image case, so no extra pass over x).
    if DP != d_in:
        x_flat = jnp.zeros((B, DP), jnp.float32).at[:, :d_in].set(x_flat)

    # ---- batch tile selection: no batch padding at all ----
    # Tiny batches: one full-extent block (valid since block == full array dim).
    # Larger batches: tile rows are a multiple of 8, capped at both `tm` and
    # ceil(B/2) so the grid has >= 2 steps (lets v7x shard across both TCs);
    # Pallas masks the partial last block, so awkward B costs no padded HBM work.
    if B <= 16:
        tm_eff = B
    else:
        tm_eff = min(tm, _round_up(pl.cdiv(B, 2), 8))
    grid = (pl.cdiv(B, tm_eff),)

    # Explicit scoped-VMEM budget: double-buffered x/out tiles + resident
    # weights/biases + headroom for in-kernel intermediates.  ~18 MiB at the
    # default tm=1024, safely inside v5e/v6e/v7x limits.
    vmem_limit = int(
        2 * tm_eff * DP * 4            # x tile, f32, double-buffered
        + 2 * tm_eff * CP * 4          # out tile, f32, double-buffered
        + 2 * (w1p.size + w2p.size + w3p.size) * 2   # bf16 weights
        + 2 * (b1p.size + b2p.size + b3p.size) * 4   # f32 biases
        + (8 << 20)                    # headroom (h1/h2 intermediates, scratch)
    )

    flops = 2 * B * (DP * HP + HP * HP + HP * CP)
    bytes_accessed = (
        B * DP * 4                                     # x read as f32
        + (w1p.size + w2p.size + w3p.size) * 2         # bf16 weights
        + (b1p.size + b2p.size + b3p.size) * 4         # f32 biases
        + B * CP * 4                                   # f32 logits out
    )

    out = pl.pallas_call(
        erm_mlp_kernel,
        out_shape=jax.ShapeDtypeStruct((B, CP), jnp.float32),
        grid=grid,
        in_specs=[
            pl.BlockSpec((tm_eff, DP), lambda i: (i, 0)),   # x: tiled over batch
            pl.BlockSpec((DP, HP), lambda i: (0, 0)),       # w1: resident
            pl.BlockSpec((1, HP), lambda i: (0, 0)),        # b1: resident
            pl.BlockSpec((HP, HP), lambda i: (0, 0)),       # w2: resident
            pl.BlockSpec((1, HP), lambda i: (0, 0)),        # b2: resident
            pl.BlockSpec((HP, CP), lambda i: (0, 0)),       # w3: resident
            pl.BlockSpec((1, CP), lambda i: (0, 0)),        # b3: resident
        ],
        out_specs=pl.BlockSpec((tm_eff, CP), lambda i: (i, 0)),
        compiler_params=pltpu.CompilerParams(
            dimension_semantics=("parallel",),
            vmem_limit_bytes=vmem_limit),
        cost_estimate=pl.CostEstimate(
            flops=flops, transcendentals=0, bytes_accessed=bytes_accessed),
    )(x_flat, w1p, b1p, w2p, b2p, w3p, b3p)

    # slice padded classes off (no batch padding was introduced)
    return out[:, :n_classes]


def init_params(key, d_in, hidden, n_classes):
    """Deterministic synthetic parameters (He-ish init)."""
    k1, k2, k3 = jax.random.split(key, 3)
    w1 = jax.random.normal(k1, (d_in, hidden), jnp.float32) * (2.0 / d_in) ** 0.5
    b1 = jnp.zeros((1, hidden), jnp.float32)
    w2 = jax.random.normal(k2, (hidden, hidden), jnp.float32) * (2.0 / hidden) ** 0.5
    b2 = jnp.zeros((1, hidden), jnp.float32)
    w3 = jax.random.normal(k3, (hidden, n_classes), jnp.float32) * (2.0 / hidden) ** 0.5
    b3 = jnp.zeros((1, n_classes), jnp.float32)
    return (w1, b1, w2, b2, w3, b3)


if __name__ == "__main__":
    key = jax.random.PRNGKey(0)
    kx, kp = jax.random.split(key)

    # small NCHW input consistent with an image-style featurizer input
    B, C, H, W = 2, 4, 16, 16
    x = jax.random.normal(kx, (B, C, H, W), jnp.float32)

    d_in = C * H * W          # 1024
    hidden = 32               # featurizer.n_outputs
    n_classes = 2             # Classifier(n_outputs, 2, False)
    params = init_params(kp, d_in, hidden, n_classes)

    prepared = prepare_params(params)     # one-time weight padding / bf16 cast
    logits = erm_forward(x, prepared)
    jax.block_until_ready(logits)
    assert logits.shape == (B, n_classes)

    # reference 1: same bf16-inputs / f32-accumulate path in plain JAX
    xf = x.reshape(B, -1)
    w1, b1, w2, b2, w3, b3 = params
    h1 = jnp.maximum(
        jnp.dot(xf.astype(jnp.bfloat16), w1.astype(jnp.bfloat16),
                preferred_element_type=jnp.float32) + b1, 0.0)
    h2 = jnp.maximum(
        jnp.dot(h1.astype(jnp.bfloat16), w2.astype(jnp.bfloat16),
                preferred_element_type=jnp.float32) + b2, 0.0)
    ref_bf16 = jnp.dot(h2.astype(jnp.bfloat16), w3.astype(jnp.bfloat16),
                       preferred_element_type=jnp.float32) + b3
    assert jnp.allclose(logits, ref_bf16, atol=1e-3, rtol=1e-3)

    # reference 2: full f32 path (loose tolerance for bf16 rounding)
    h1f = jnp.maximum(xf @ w1 + b1, 0.0)
    h2f = jnp.maximum(h1f @ w2 + b2, 0.0)
    ref_f32 = h2f @ w3 + b3
    assert jnp.allclose(logits, ref_f32, atol=1e-1, rtol=5e-2)

    # TODO(synk): ERM.update (Adam optimizer / cross-entropy backward) is
    # training logic, not part of forward(); only the forward pass is implemented.
    print("KERNEL_OK")
</pallas_src>

<mosaic_0001>
module attributes {stable_mosaic.version = 11 : i64} {
  func.func @erm_mlp_kernel(%arg0: i32, %arg1: memref<2x1024xf32, #tpu.memory_space<vmem>>, %arg2: memref<1024x128xbf16, #tpu.memory_space<vmem>>, %arg3: memref<1x128xf32, #tpu.memory_space<vmem>>, %arg4: memref<128x128xbf16, #tpu.memory_space<vmem>>, %arg5: memref<1x128xf32, #tpu.memory_space<vmem>>, %arg6: memref<128x128xbf16, #tpu.memory_space<vmem>>, %arg7: memref<1x128xf32, #tpu.memory_space<vmem>>, %arg8: memref<2x128xf32, #tpu.memory_space<vmem>>) attributes {dimension_semantics = [#tpu.dimension_semantics<parallel>], iteration_bounds = array<i64: 1>, scalar_prefetch = 0 : i64, scratch_operands = 0 : i64, tpu.core_type = #tpu.core_type<tc>, window_params = [{transform_indices = @transform_0, window_bounds = array<i64: 2, 1024>}, {pipeline_mode = #tpu.pipeline_mode<synchronous>, transform_indices = @transform_1, window_bounds = array<i64: 1024, 128>}, {pipeline_mode = #tpu.pipeline_mode<synchronous>, transform_indices = @transform_2, window_bounds = array<i64: 1, 128>}, {pipeline_mode = #tpu.pipeline_mode<synchronous>, transform_indices = @transform_3, window_bounds = array<i64: 128, 128>}, {pipeline_mode = #tpu.pipeline_mode<synchronous>, transform_indices = @transform_4, window_bounds = array<i64: 1, 128>}, {pipeline_mode = #tpu.pipeline_mode<synchronous>, transform_indices = @transform_5, window_bounds = array<i64: 128, 128>}, {pipeline_mode = #tpu.pipeline_mode<synchronous>, transform_indices = @transform_6, window_bounds = array<i64: 1, 128>}, {transform_indices = @transform_7, window_bounds = array<i64: 2, 128>}]} {
    %c0 = arith.constant 0 : index
    %c0_0 = arith.constant 0 : index
    %0 = vector.load %arg1[%c0, %c0_0] : memref<2x1024xf32, #tpu.memory_space<vmem>>, vector<2x1024xf32>
    %1 = arith.truncf %0 : vector<2x1024xf32> to vector<2x1024xbf16>
    %c0_1 = arith.constant 0 : index
    %c0_2 = arith.constant 0 : index
    %2 = vector.load %arg2[%c0_1, %c0_2] : memref<1024x128xbf16, #tpu.memory_space<vmem>>, vector<1024x128xbf16>
    %cst = arith.constant dense<0.000000e+00> : vector<2x128xf32>
    %3 = tpu.matmul %1, %2, %cst {dimension_numbers = #tpu.dot_dimension_numbers<[1], [0], [0], [1], [0, 0, 1, 1], [], []>} : vector<2x1024xbf16>, vector<1024x128xbf16>, vector<2x128xf32> -> vector<2x128xf32>
    %c0_3 = arith.constant 0 : index
    %c0_4 = arith.constant 0 : index
    %4 = vector.load %arg3[%c0_3, %c0_4] : memref<1x128xf32, #tpu.memory_space<vmem>>, vector<1x128xf32>
    %5 = vector.broadcast %4 : vector<1x128xf32> to vector<2x128xf32>
    %6 = arith.addf %3, %5 : vector<2x128xf32>
    %cst_5 = arith.constant 0.000000e+00 : f32
    %7 = vector.broadcast %cst_5 : f32 to vector<2x128xf32>
    %8 = arith.maximumf %6, %7 : vector<2x128xf32>
    %9 = arith.truncf %8 : vector<2x128xf32> to vector<2x128xbf16>
    %c0_6 = arith.constant 0 : index
    %c0_7 = arith.constant 0 : index
    %10 = vector.load %arg4[%c0_6, %c0_7] : memref<128x128xbf16, #tpu.memory_space<vmem>>, vector<128x128xbf16>
    %cst_8 = arith.constant dense<0.000000e+00> : vector<2x128xf32>
    %11 = tpu.matmul %9, %10, %cst_8 {dimension_numbers = #tpu.dot_dimension_numbers<[1], [0], [0], [1], [0, 0, 1, 1], [], []>} : vector<2x128xbf16>, vector<128x128xbf16>, vector<2x128xf32> -> vector<2x128xf32>
    %c0_9 = arith.constant 0 : index
    %c0_10 = arith.constant 0 : index
    %12 = vector.load %arg5[%c0_9, %c0_10] : memref<1x128xf32, #tpu.memory_space<vmem>>, vector<1x128xf32>
    %13 = vector.broadcast %12 : vector<1x128xf32> to vector<2x128xf32>
    %14 = arith.addf %11, %13 : vector<2x128xf32>
    %cst_11 = arith.constant 0.000000e+00 : f32
    %15 = vector.broadcast %cst_11 : f32 to vector<2x128xf32>
    %16 = arith.maximumf %14, %15 : vector<2x128xf32>
    %17 = arith.truncf %16 : vector<2x128xf32> to vector<2x128xbf16>
    %c0_12 = arith.constant 0 : index
    %c0_13 = arith.constant 0 : index
    %18 = vector.load %arg6[%c0_12, %c0_13] : memref<128x128xbf16, #tpu.memory_space<vmem>>, vector<128x128xbf16>
    %cst_14 = arith.constant dense<0.000000e+00> : vector<2x128xf32>
    %19 = tpu.matmul %17, %18, %cst_14 {dimension_numbers = #tpu.dot_dimension_numbers<[1], [0], [0], [1], [0, 0, 1, 1], [], []>} : vector<2x128xbf16>, vector<128x128xbf16>, vector<2x128xf32> -> vector<2x128xf32>
    %c0_15 = arith.constant 0 : index
    %c0_16 = arith.constant 0 : index
    %20 = vector.load %arg7[%c0_15, %c0_16] : memref<1x128xf32, #tpu.memory_space<vmem>>, vector<1x128xf32>
    %21 = vector.broadcast %20 : vector<1x128xf32> to vector<2x128xf32>
    %22 = arith.addf %19, %21 : vector<2x128xf32>
    %c0_17 = arith.constant 0 : index
    %c0_18 = arith.constant 0 : index
    %23 = vector.load %arg8[%c0_17, %c0_18] : memref<2x128xf32, #tpu.memory_space<vmem>>, vector<2x128xf32>
    tpu.vector_store %arg8[%c0_17, %c0_18], %22 {strides = array<i32>} : memref<2x128xf32, #tpu.memory_space<vmem>>, vector<2x128xf32>,
    return
  }
  func.func @transform_0(%arg0: i32) -> (i32, i32) {
    %c0_i32 = arith.constant 0 : i32
    %c0_i32_0 = arith.constant 0 : i32
    return %arg0, %c0_i32 : i32, i32
  }
  func.func @transform_1(%arg0: i32) -> (i32, i32) {
    %c0_i32 = arith.constant 0 : i32
    %c0_i32_0 = arith.constant 0 : i32
    %c0_i32_1 = arith.constant 0 : i32
    return %c0_i32, %c0_i32_0 : i32, i32
  }
  func.func @transform_2(%arg0: i32) -> (i32, i32) {
    %c0_i32 = arith.constant 0 : i32
    %c0_i32_0 = arith.constant 0 : i32
    %c0_i32_1 = arith.constant 0 : i32
    return %c0_i32, %c0_i32_0 : i32, i32
  }
  func.func @transform_3(%arg0: i32) -> (i32, i32) {
    %c0_i32 = arith.constant 0 : i32
    %c0_i32_0 = arith.constant 0 : i32
    %c0_i32_1 = arith.constant 0 : i32
    return %c0_i32, %c0_i32_0 : i32, i32
  }
  func.func @transform_4(%arg0: i32) -> (i32, i32) {
    %c0_i32 = arith.constant 0 : i32
    %c0_i32_0 = arith.constant 0 : i32
    %c0_i32_1 = arith.constant 0 : i32
    return %c0_i32, %c0_i32_0 : i32, i32
  }
  func.func @transform_5(%arg0: i32) -> (i32, i32) {
    %c0_i32 = arith.constant 0 : i32
    %c0_i32_0 = arith.constant 0 : i32
    %c0_i32_1 = arith.constant 0 : i32
    return %c0_i32, %c0_i32_0 : i32, i32
  }
  func.func @transform_6(%arg0: i32) -> (i32, i32) {
    %c0_i32 = arith.constant 0 : i32
    %c0_i32_0 = arith.constant 0 : i32
    %c0_i32_1 = arith.constant 0 : i32
    return %c0_i32, %c0_i32_0 : i32, i32
  }
  func.func @transform_7(%arg0: i32) -> (i32, i32) {
    %c0_i32 = arith.constant 0 : i32
    %c0_i32_0 = arith.constant 0 : i32
    return %arg0, %c0_i32 : i32, i32
  }
}

</mosaic_0001>

<llo_original>
// kernel: tpu_custom_call.1
$region0: #{tpu_custom_call.1}
  #allocation0 [shape = 'u32[]', space=smem, size = 0x4, offset = 0x4, fixed_abs, tag = 'smem constant byte address 0x4 - core index']
  #allocation1 [shape = 'u32[144,128]{1,0:T(1,128)}', space=vmem, size = 0x12000, scoped, tag = 'internal scratch']
  %s0 = inlined_call_operand.hbm [shape: f32[2,1024], index: 0, kind: input, shape index: {}]
  %s1 = inlined_call_operand.hbm [shape: bf16[1024,128], index: 1, kind: input, shape index: {}]
  %s2 = inlined_call_operand.vmem [shape: f32[1,128], index: 2, kind: input, shape index: {}]
  %s3 = inlined_call_operand.hbm [shape: bf16[128,128], index: 3, kind: input, shape index: {}]
  %s4 = inlined_call_operand.vmem [shape: f32[1,128], index: 4, kind: input, shape index: {}]
  %s5 = inlined_call_operand.hbm [shape: bf16[128,128], index: 5, kind: input, shape index: {}]
  %s6 = inlined_call_operand.vmem [shape: f32[1,128], index: 6, kind: input, shape index: {}]
  %s7 = inlined_call_operand.hbm [shape: f32[2,128], index: 7, kind: output, shape index: {}]
  %s8 = sld [smem:[#allocation0]]
  $region54: #{tpu_custom_call.1} parent=0
    _
  %s10 = ssub.s32 1, %s8
  %s11 = scalar_select 0, %s10, %s8
  $region1: #{tpu_custom_call.1} parent=0
    #allocation2 [shape = 'u8[8192]{0}', space=vmem, size = 0x2000, scoped, tag = 'input window, operand 0, single buffered']
    #allocation3 [shape = 's32[1]{0}', space=sflag, size = 0x4, scoped, tag = 'scoped memory for tpu_custom_call.1']
    #allocation4 [shape = 's32[1]{0}', space=sflag, size = 0x4, scoped, tag = 'scoped memory for tpu_custom_call.1']
    #allocation5 [shape = 'u8[262144]{0}', space=vmem, size = 0x40000, scoped, tag = 'input window, operand 1, single buffered']
    #allocation6 [shape = 's32[1]{0}', space=sflag, size = 0x4, scoped, tag = 'scoped memory for tpu_custom_call.1']
    #allocation7 [shape = 'u8[32768]{0}', space=vmem, size = 0x8000, scoped, tag = 'input window, operand 3, single buffered']
    #allocation8 [shape = 'u8[32768]{0}', space=vmem, size = 0x8000, scoped, tag = 'input window, operand 5, single buffered']
    #allocation9 [shape = 's32[1]{0}', space=sflag, size = 0x4, scoped, tag = 'scoped memory for tpu_custom_call.1']
    #allocation10 [shape = 'u8[1024]{0}', space=vmem, size = 0x400, scoped, tag = 'output window, operand 0, single buffered']
    %12 = vsyncpa [#allocation3], 0
    %13 = vsyncpa [#allocation6], 0
    %14 = vsyncpa [#allocation9], 0
    %15 = vsyncpa [#allocation4], 0
    // Predicated region
    $region2: #{tpu_custom_call.1} parent=1 // pred_check
      _
    $region3: #{tpu_custom_call.1} parent=1 // pred_check_branch
      %17 = sbr.rel (0) target = $region5
    $region4: #{tpu_custom_call.1} parent=1 // pred_region
      %s19 = ssub.s32 256, 256
      %20 = vsyncadd [#allocation3], %s19
      %s22 = sshll.u32 [#allocation2], 4
      %s23 = int_to_ptr.vmem [resolvable:$true] %s22
      %25 = dma.hbm_to_vmem [thread:$0]  %s0, 256, %s23, [#allocation3]
    $region5: #{tpu_custom_call.1} parent=1 // pred_fallthru
      _
    // Predicated region
    $region6: #{tpu_custom_call.1} parent=1 // pred_check
      _
    $region7: #{tpu_custom_call.1} parent=1 // pred_check_branch
      %27 = sbr.rel (0) target = $region9
    $region8: #{tpu_custom_call.1} parent=1 // pred_region
      %s29 = ssub.s32 8192, 8192
      %30 = vsyncadd [#allocation6], %s29
      %s31 = sshll.u32 [#allocation5], 4
      %s32 = int_to_ptr.vmem [resolvable:$true] %s31
      %37 = dma.hbm_to_vmem [thread:$0]  %s1, 8192, %s32, [#allocation6], 64, 64, 4
    $region9: #{tpu_custom_call.1} parent=1 // pred_fallthru
      _
    // Predicated region
    $region10: #{tpu_custom_call.1} parent=1 // pred_check
      _
    $region11: #{tpu_custom_call.1} parent=1 // pred_check_branch
      %39 = sbr.rel (0) target = $region13
    $region12: #{tpu_custom_call.1} parent=1 // pred_region
      _
    $region13: #{tpu_custom_call.1} parent=1 // pred_fallthru
      _
    // Predicated region
    $region14: #{tpu_custom_call.1} parent=1 // pred_check
      _
    $region15: #{tpu_custom_call.1} parent=1 // pred_check_branch
      %41 = sbr.rel (0) target = $region17
    $region16: #{tpu_custom_call.1} parent=1 // pred_region
      %s43 = ssub.s32 1024, 1024
      %44 = vsyncadd [#allocation6], %s43
      %s45 = sshll.u32 [#allocation7], 4
      %s46 = int_to_ptr.vmem [resolvable:$true] %s45
      %51 = dma.hbm_to_vmem [thread:$0]  %s3, 1024, %s46, [#allocation6], 64, 64, 4
    $region17: #{tpu_custom_call.1} parent=1 // pred_fallthru
      _
    // Predicated region
    $region18: #{tpu_custom_call.1} parent=1 // pred_check
      _
    $region19: #{tpu_custom_call.1} parent=1 // pred_check_branch
      %53 = sbr.rel (0) target = $region21
    $region20: #{tpu_custom_call.1} parent=1 // pred_region
      _
    $region21: #{tpu_custom_call.1} parent=1 // pred_fallthru
      _
    // Predicated region
    $region22: #{tpu_custom_call.1} parent=1 // pred_check
      _
    $region23: #{tpu_custom_call.1} parent=1 // pred_check_branch
      %55 = sbr.rel (0) target = $region25
    $region24: #{tpu_custom_call.1} parent=1 // pred_region
      %s57 = ssub.s32 1024, 1024
      %58 = vsyncadd [#allocation9], %s57
      %s59 = sshll.u32 [#allocation8], 4
      %s60 = int_to_ptr.vmem [resolvable:$true] %s59
      %65 = dma.hbm_to_vmem [thread:$0]  %s5, 1024, %s60, [#allocation9], 64, 64, 4
    $region25: #{tpu_custom_call.1} parent=1 // pred_fallthru
      _
    // Predicated region
    $region26: #{tpu_custom_call.1} parent=1 // pred_check
      _
    $region27: #{tpu_custom_call.1} parent=1 // pred_check_branch
      %67 = sbr.rel (0) target = $region29
    $region28: #{tpu_custom_call.1} parent=1 // pred_region
      _
    $region29: #{tpu_custom_call.1} parent=1 // pred_fallthru
      _
    // Predicated region
    $region30: #{tpu_custom_call.1} parent=1 // pred_check
      _
    $region31: #{tpu_custom_call.1} parent=1 // pred_check_branch
      %69 = sbr.rel (0) target = $region33
    $region32: #{tpu_custom_call.1} parent=1 // pred_region
      %70 = dma.done [#allocation3], 256
    $region33: #{tpu_custom_call.1} parent=1 // pred_fallthru
      _
    // Predicated region
    $region34: #{tpu_custom_call.1} parent=1 // pred_check
      _
    $region35: #{tpu_custom_call.1} parent=1 // pred_check_branch
      %72 = sbr.rel (0) target = $region37
    $region36: #{tpu_custom_call.1} parent=1 // pred_region
      %73 = dma.done [#allocation6], 8192
    $region37: #{tpu_custom_call.1} parent=1 // pred_fallthru
      _
    // Predicated region
    $region38: #{tpu_custom_call.1} parent=1 // pred_check
      _
    $region39: #{tpu_custom_call.1} parent=1 // pred_check_branch
      %75 = sbr.rel (0) target = $region41
    $region40: #{tpu_custom_call.1} parent=1 // pred_region
      %76 = dma.done [#allocation6], 1024
    $region41: #{tpu_custom_call.1} parent=1 // pred_fallthru
      _
    // Predicated region
    $region42: #{tpu_custom_call.1} parent=1 // pred_check
      _
    $region43: #{tpu_custom_call.1} parent=1 // pred_check_branch
      %78 = sbr.rel (0) target = $region45
    $region44: #{tpu_custom_call.1} parent=1 // pred_region
      %79 = dma.done [#allocation9], 1024
    $region45: #{tpu_custom_call.1} parent=1 // pred_fallthru
      _
    %v81 = vld [vmem:[#allocation2] sm:$0xff]
    %v82 = vld [vmem:[#allocation2 + $0x8] sm:$0xff]
    %v85 = vcombine.high %v81, %v81
    %v87 = vunpack.c.l.s4 1983009808
    %v88 = vunpack.c.0.s8 %v87
    %v89 = vlaneseq
    %v90 = vshrl.u32 %v89, 7
    %v91 = vsub.s32 %v88, %v90
    %v92 = vrot.slane %v81, %v91
    %v94 = vunpack.c.l.s4 1983009808
    %v95 = vunpack.c.0.s8 %v94
    %v96 = vlaneseq
    %v97 = vshrl.u32 %v96, 7
    %v98 = vsub.s32 %v95, %v97
    %v99 = vrot.slane %v85, %v98
    %v100 = vcombine.high %v92, %v92
    %v101 = vcombine.high %v99, %v99
    %v102 = vcombine.high %v82, %v82
    %v104 = vunpack.c.l.s4 1983009808
    %v105 = vunpack.c.0.s8 %v104
    %v106 = vlaneseq
    %v107 = vshrl.u32 %v106, 7
    %v108 = vsub.s32 %v105, %v107
    %v109 = vrot.slane %v82, %v108
    %v111 = vunpack.c.l.s4 1983009808
    %v112 = vunpack.c.0.s8 %v111
    %v113 = vlaneseq
    %v114 = vshrl.u32 %v113, 7
    %v115 = vsub.s32 %v112, %v114
    %v116 = vrot.slane %v102, %v115
    %v117 = vcombine.high %v109, %v109
    %v118 = vcombine.high %v116, %v116
    %v127 = vpack.c.bf16 %v92, %v92
    %v128 = vpack.c.bf16 %v100, %v100
    %v129 = vpack.c.bf16 %v99, %v99
    %v130 = vpack.c.bf16 %v101, %v101
    %v131 = vpack.c.bf16 %v109, %v109
    %v132 = vpack.c.bf16 %v117, %v117
    %v133 = vpack.c.bf16 %v116, %v116
    %v134 = vpack.c.bf16 %v118, %v118
    %v135 = vld [vmem:[#allocation5] sm:$0xf]
    %v136 = vld [vmem:[#allocation5 + $0x4] sm:$0xf]
    %v137 = vld [vmem:[#allocation5 + $0x8] sm:$0xf]
    %v138 = vld [vmem:[#allocation5 + $0xc] sm:$0xf]
    %v139 = vld [vmem:[#allocation5 + $0x10] sm:$0xf]
    %v140 = vld [vmem:[#allocation5 + $0x14] sm:$0xf]
    %v141 = vld [vmem:[#allocation5 + $0x18] sm:$0xf]
    %v142 = vld [vmem:[#allocation5 + $0x1c] sm:$0xf]
    %v143 = vld [vmem:[#allocation5 + $0x20] sm:$0xf]
    %v144 = vld [vmem:[#allocation5 + $0x24] sm:$0xf]
    %v145 = vld [vmem:[#allocation5 + $0x28] sm:$0xf]
    %v146 = vld [vmem:[#allocation5 + $0x2c] sm:$0xf]
    %v147 = vld [vmem:[#allocation5 + $0x30] sm:$0xf]
    %v148 = vld [vmem:[#allocation5 + $0x34] sm:$0xf]
    %v149 = vld [vmem:[#allocation5 + $0x38] sm:$0xf]
    %v150 = vld [vmem:[#allocation5 + $0x3c] sm:$0xf]
    %v151 = vld [vmem:[#allocation5 + $0x40] sm:$0xf]
    %v152 = vld [vmem:[#allocation5 + $0x44] sm:$0xf]
    %v153 = vld [vmem:[#allocation5 + $0x48] sm:$0xf]
    %v154 = vld [vmem:[#allocation5 + $0x4c] sm:$0xf]
    %v155 = vld [vmem:[#allocation5 + $0x50] sm:$0xf]
    %v156 = vld [vmem:[#allocation5 + $0x54] sm:$0xf]
    %v157 = vld [vmem:[#allocation5 + $0x58] sm:$0xf]
    %v158 = vld [vmem:[#allocation5 + $0x5c] sm:$0xf]
    %v159 = vld [vmem:[#allocation5 + $0x60] sm:$0xf]
    %v160 = vld [vmem:[#allocation5 + $0x64] sm:$0xf]
    %v161 = vld [vmem:[#allocation5 + $0x68] sm:$0xf]
    %v162 = vld [vmem:[#allocation5 + $0x6c] sm:$0xf]
    %v163 = vld [vmem:[#allocation5 + $0x70] sm:$0xf]
    %v164 = vld [vmem:[#allocation5 + $0x74] sm:$0xf]
    %v165 = vld [vmem:[#allocation5 + $0x78] sm:$0xf]
    %v166 = vld [vmem:[#allocation5 + $0x7c] sm:$0xf]
    %v167 = vld [vmem:[#allocation5 + $0x80] sm:$0xf]
    %v168 = vld [vmem:[#allocation5 + $0x84] sm:$0xf]
    %v169 = vld [vmem:[#allocation5 + $0x88] sm:$0xf]
    %v170 = vld [vmem:[#allocation5 + $0x8c] sm:$0xf]
    %v171 = vld [vmem:[#allocation5 + $0x90] sm:$0xf]
    %v172 = vld [vmem:[#allocation5 + $0x94] sm:$0xf]
    %v173 = vld [vmem:[#allocation5 + $0x98] sm:$0xf]
    %v174 = vld [vmem:[#allocation5 + $0x9c] sm:$0xf]
    %v175 = vld [vmem:[#allocation5 + $0xa0] sm:$0xf]
    %v176 = vld [vmem:[#allocation5 + $0xa4] sm:$0xf]
    %v177 = vld [vmem:[#allocation5 + $0xa8] sm:$0xf]
    %v178 = vld [vmem:[#allocation5 + $0xac] sm:$0xf]
    %v179 = vld [vmem:[#allocation5 + $0xb0] sm:$0xf]
    %v180 = vld [vmem:[#allocation5 + $0xb4] sm:$0xf]
    %v181 = vld [vmem:[#allocation5 + $0xb8] sm:$0xf]
    %v182 = vld [vmem:[#allocation5 + $0xbc] sm:$0xf]
    %v183 = vld [vmem:[#allocation5 + $0xc0] sm:$0xf]
    %v184 = vld [vmem:[#allocation5 + $0xc4] sm:$0xf]
    %v185 = vld [vmem:[#allocation5 + $0xc8] sm:$0xf]
    %v186 = vld [vmem:[#allocation5 + $0xcc] sm:$0xf]
    %v187 = vld [vmem:[#allocation5 + $0xd0] sm:$0xf]
    %v188 = vld [vmem:[#allocation5 + $0xd4] sm:$0xf]
    %v189 = vld [vmem:[#allocation5 + $0xd8] sm:$0xf]
    %v190 = vld [vmem:[#allocation5 + $0xdc] sm:$0xf]
    %v191 = vld [vmem:[#allocation5 + $0xe0] sm:$0xf]
    %v192 = vld [vmem:[#allocation5 + $0xe4] sm:$0xf]
    %v193 = vld [vmem:[#allocation5 + $0xe8] sm:$0xf]
    %v194 = vld [vmem:[#allocation5 + $0xec] sm:$0xf]
    %v195 = vld [vmem:[#allocation5 + $0xf0] sm:$0xf]
    %v196 = vld [vmem:[#allocation5 + $0xf4] sm:$0xf]
    %v197 = vld [vmem:[#allocation5 + $0xf8] sm:$0xf]
    %v198 = vld [vmem:[#allocation5 + $0xfc] sm:$0xf]
    %v199 = vld [vmem:[#allocation5 + $0x100] sm:$0xf]
    %v200 = vld [vmem:[#allocation5 + $0x104] sm:$0xf]
    %v201 = vld [vmem:[#allocation5 + $0x108] sm:$0xf]
    %v202 = vld [vmem:[#allocation5 + $0x10c] sm:$0xf]
    %v203 = vld [vmem:[#allocation5 + $0x110] sm:$0xf]
    %v204 = vld [vmem:[#allocation5 + $0x114] sm:$0xf]
    %v205 = vld [vmem:[#allocation5 + $0x118] sm:$0xf]
    %v206 = vld [vmem:[#allocation5 + $0x11c] sm:$0xf]
    %v207 = vld [vmem:[#allocation5 + $0x120] sm:$0xf]
    %v208 = vld [vmem:[#allocation5 + $0x124] sm:$0xf]
    %v209 = vld [vmem:[#allocation5 + $0x128] sm:$0xf]
    %v210 = vld [vmem:[#allocation5 + $0x12c] sm:$0xf]
    %v211 = vld [vmem:[#allocation5 + $0x130] sm:$0xf]
    %v212 = vld [vmem:[#allocation5 + $0x134] sm:$0xf]
    %v213 = vld [vmem:[#allocation5 + $0x138] sm:$0xf]
    %v214 = vld [vmem:[#allocation5 + $0x13c] sm:$0xf]
    %v215 = vld [vmem:[#allocation5 + $0x140] sm:$0xf]
    %v216 = vld [vmem:[#allocation5 + $0x144] sm:$0xf]
    %v217 = vld [vmem:[#allocation5 + $0x148] sm:$0xf]
    %v218 = vld [vmem:[#allocation5 + $0x14c] sm:$0xf]
    %v219 = vld [vmem:[#allocation5 + $0x150] sm:$0xf]
    %v220 = vld [vmem:[#allocation5 + $0x154] sm:$0xf]
    %v221 = vld [vmem:[#allocation5 + $0x158] sm:$0xf]
    %v222 = vld [vmem:[#allocation5 + $0x15c] sm:$0xf]
    %v223 = vld [vmem:[#allocation5 + $0x160] sm:$0xf]
    %v224 = vld [vmem:[#allocation5 + $0x164] sm:$0xf]
    %v225 = vld [vmem:[#allocation5 + $0x168] sm:$0xf]
    %v226 = vld [vmem:[#allocation5 + $0x16c] sm:$0xf]
    %v227 = vld [vmem:[#allocation5 + $0x170] sm:$0xf]
    %v228 = vld [vmem:[#allocation5 + $0x174] sm:$0xf]
    %v229 = vld [vmem:[#allocation5 + $0x178] sm:$0xf]
    %v230 = vld [vmem:[#allocation5 + $0x17c] sm:$0xf]
    %v231 = vld [vmem:[#allocation5 + $0x180] sm:$0xf]
    %v232 = vld [vmem:[#allocation5 + $0x184] sm:$0xf]
    %v233 = vld [vmem:[#allocation5 + $0x188] sm:$0xf]
    %v234 = vld [vmem:[#allocation5 + $0x18c] sm:$0xf]
    %v235 = vld [vmem:[#allocation5 + $0x190] sm:$0xf]
    %v236 = vld [vmem:[#allocation5 + $0x194] sm:$0xf]
    %v237 = vld [vmem:[#allocation5 + $0x198] sm:$0xf]
    %v238 = vld [vmem:[#allocation5 + $0x19c] sm:$0xf]
    %v239 = vld [vmem:[#allocation5 + $0x1a0] sm:$0xf]
    %v240 = vld [vmem:[#allocation5 + $0x1a4] sm:$0xf]
    %v241 = vld [vmem:[#allocation5 + $0x1a8] sm:$0xf]
    %v242 = vld [vmem:[#allocation5 + $0x1ac] sm:$0xf]
    %v243 = vld [vmem:[#allocation5 + $0x1b0] sm:$0xf]
    %v244 = vld [vmem:[#allocation5 + $0x1b4] sm:$0xf]
    %v245 = vld [vmem:[#allocation5 + $0x1b8] sm:$0xf]
    %v246 = vld [vmem:[#allocation5 + $0x1bc] sm:$0xf]
    %v247 = vld [vmem:[#allocation5 + $0x1c0] sm:$0xf]
    %v248 = vld [vmem:[#allocation5 + $0x1c4] sm:$0xf]
    %v249 = vld [vmem:[#allocation5 + $0x1c8] sm:$0xf]
    %v250 = vld [vmem:[#allocation5 + $0x1cc] sm:$0xf]
    %v251 = vld [vmem:[#allocation5 + $0x1d0] sm:$0xf]
    %v252 = vld [vmem:[#allocation5 + $0x1d4] sm:$0xf]
    %v253 = vld [vmem:[#allocation5 + $0x1d8] sm:$0xf]
    %v254 = vld [vmem:[#allocation5 + $0x1dc] sm:$0xf]
    %v255 = vld [vmem:[#allocation5 + $0x1e0] sm:$0xf]
    %v256 = vld [vmem:[#allocation5 + $0x1e4] sm:$0xf]
    %v257 = vld [vmem:[#allocation5 + $0x1e8] sm:$0xf]
    %v258 = vld [vmem:[#allocation5 + $0x1ec] sm:$0xf]
    %v259 = vld [vmem:[#allocation5 + $0x1f0] sm:$0xf]
    %v260 = vld [vmem:[#allocation5 + $0x1f4] sm:$0xf]
    %v261 = vld [vmem:[#allocation5 + $0x1f8] sm:$0xf]
    %v262 = vld [vmem:[#allocation5 + $0x1fc] sm:$0xf]
    %v263 = vld [vmem:[%s2] sm:$0x1]
    %v265 = vlaneseq
    %v266 = vshrl.u32 %v265, 7
    %v267 = vsub.s32 0, %v266
    %v268 = vrot.slane %v263, %v267
    %v398 = vunpack.c.l.b16 %v135
    %v399 = vunpack.c.l.b16 %v136
    %v400 = vunpack.c.l.b16 %v137
    %v401 = vunpack.c.l.b16 %v138
    %v402 = vunpack.c.l.b16 %v139
    %v403 = vunpack.c.l.b16 %v140
    %v404 = vunpack.c.l.b16 %v141
    %v405 = vunpack.c.l.b16 %v142
    %v406 = vunpack.c.l.b16 %v143
    %v407 = vunpack.c.l.b16 %v144
    %v408 = vunpack.c.l.b16 %v145
    %v409 = vunpack.c.l.b16 %v146
    %v410 = vunpack.c.l.b16 %v147
    %v411 = vunpack.c.l.b16 %v148
    %v412 = vunpack.c.l.b16 %v149
    %v413 = vunpack.c.l.b16 %v150
    %v414 = vunpack.c.l.b16 %v151
    %v415 = vunpack.c.l.b16 %v152
    %v416 = vunpack.c.l.b16 %v153
    %v417 = vunpack.c.l.b16 %v154
    %v418 = vunpack.c.l.b16 %v155
    %v419 = vunpack.c.l.b16 %v156
    %v420 = vunpack.c.l.b16 %v157
    %v421 = vunpack.c.l.b16 %v158
    %v422 = vunpack.c.l.b16 %v159
    %v423 = vunpack.c.l.b16 %v160
    %v424 = vunpack.c.l.b16 %v161
    %v425 = vunpack.c.l.b16 %v162
    %v426 = vunpack.c.l.b16 %v163
    %v427 = vunpack.c.l.b16 %v164
    %v428 = vunpack.c.l.b16 %v165
    %v429 = vunpack.c.l.b16 %v166
    %v430 = vunpack.c.l.b16 %v167
    %v431 = vunpack.c.l.b16 %v168
    %v432 = vunpack.c.l.b16 %v169
    %v433 = vunpack.c.l.b16 %v170
    %v434 = vunpack.c.l.b16 %v171
    %v435 = vunpack.c.l.b16 %v172
    %v436 = vunpack.c.l.b16 %v173
    %v437 = vunpack.c.l.b16 %v174
    %v438 = vunpack.c.l.b16 %v175
    %v439 = vunpack.c.l.b16 %v176
    %v440 = vunpack.c.l.b16 %v177
    %v441 = vunpack.c.l.b16 %v178
    %v442 = vunpack.c.l.b16 %v179
    %v443 = vunpack.c.l.b16 %v180
    %v444 = vunpack.c.l.b16 %v181
    %v445 = vunpack.c.l.b16 %v182
    %v446 = vunpack.c.l.b16 %v183
    %v447 = vunpack.c.l.b16 %v184
    %v448 = vunpack.c.l.b16 %v185
    %v449 = vunpack.c.l.b16 %v186
    %v450 = vunpack.c.l.b16 %v187
    %v451 = vunpack.c.l.b16 %v188
    %v452 = vunpack.c.l.b16 %v189
    %v453 = vunpack.c.l.b16 %v190
    %v454 = vunpack.c.l.b16 %v191
    %v455 = vunpack.c.l.b16 %v192
    %v456 = vunpack.c.l.b16 %v193
    %v457 = vunpack.c.l.b16 %v194
    %v458 = vunpack.c.l.b16 %v195
    %v459 = vunpack.c.l.b16 %v196
    %v460 = vunpack.c.l.b16 %v197
    %v461 = vunpack.c.l.b16 %v198
    %v462 = vunpack.c.l.b16 %v199
    %v463 = vunpack.c.l.b16 %v200
    %v464 = vunpack.c.l.b16 %v201
    %v465 = vunpack.c.l.b16 %v202
    %v466 = vunpack.c.l.b16 %v203
    %v467 = vunpack.c.l.b16 %v204
    %v468 = vunpack.c.l.b16 %v205
    %v469 = vunpack.c.l.b16 %v206
    %v470 = vunpack.c.l.b16 %v207
    %v471 = vunpack.c.l.b16 %v208
    %v472 = vunpack.c.l.b16 %v209
    %v473 = vunpack.c.l.b16 %v210
    %v474 = vunpack.c.l.b16 %v211
    %v475 = vunpack.c.l.b16 %v212
    %v476 = vunpack.c.l.b16 %v213
    %v477 = vunpack.c.l.b16 %v214
    %v478 = vunpack.c.l.b16 %v215
    %v479 = vunpack.c.l.b16 %v216
    %v480 = vunpack.c.l.b16 %v217
    %v481 = vunpack.c.l.b16 %v218
    %v482 = vunpack.c.l.b16 %v219
    %v483 = vunpack.c.l.b16 %v220
    %v484 = vunpack.c.l.b16 %v221
    %v485 = vunpack.c.l.b16 %v222
    %v486 = vunpack.c.l.b16 %v223
    %v487 = vunpack.c.l.b16 %v224
    %v488 = vunpack.c.l.b16 %v225
    %v489 = vunpack.c.l.b16 %v226
    %v490 = vunpack.c.l.b16 %v227
    %v491 = vunpack.c.l.b16 %v228
    %v492 = vunpack.c.l.b16 %v229
    %v493 = vunpack.c.l.b16 %v230
    %v494 = vunpack.c.l.b16 %v231
    %v495 = vunpack.c.l.b16 %v232
    %v496 = vunpack.c.l.b16 %v233
    %v497 = vunpack.c.l.b16 %v234
    %v498 = vunpack.c.l.b16 %v235
    %v499 = vunpack.c.l.b16 %v236
    %v500 = vunpack.c.l.b16 %v237
    %v501 = vunpack.c.l.b16 %v238
    %v502 = vunpack.c.l.b16 %v239
    %v503 = vunpack.c.l.b16 %v240
    %v504 = vunpack.c.l.b16 %v241
    %v505 = vunpack.c.l.b16 %v242
    %v506 = vunpack.c.l.b16 %v243
    %v507 = vunpack.c.l.b16 %v244
    %v508 = vunpack.c.l.b16 %v245
    %v509 = vunpack.c.l.b16 %v246
    %v510 = vunpack.c.l.b16 %v247
    %v511 = vunpack.c.l.b16 %v248
    %v512 = vunpack.c.l.b16 %v249
    %v513 = vunpack.c.l.b16 %v250
    %v514 = vunpack.c.l.b16 %v251
    %v515 = vunpack.c.l.b16 %v252
    %v516 = vunpack.c.l.b16 %v253
    %v517 = vunpack.c.l.b16 %v254
    %v518 = vunpack.c.l.b16 %v255
    %v519 = vunpack.c.l.b16 %v256
    %v520 = vunpack.c.l.b16 %v257
    %v521 = vunpack.c.l.b16 %v258
    %v522 = vunpack.c.l.b16 %v259
    %v523 = vunpack.c.l.b16 %v260
    %v524 = vunpack.c.l.b16 %v261
    %v525 = vunpack.c.l.b16 %v262
    %v526 = vpack.c.b16 %v399, %v398
    %v527 = vpack.c.b16 %v401, %v400
    %v528 = vpack.c.b16 %v403, %v402
    %v529 = vpack.c.b16 %v405, %v404
    %v530 = vpack.c.b16 %v407, %v406
    %v531 = vpack.c.b16 %v409, %v408
    %v532 = vpack.c.b16 %v411, %v410
    %v533 = vpack.c.b16 %v413, %v412
    %v534 = vpack.c.b16 %v415, %v414
    %v535 = vpack.c.b16 %v417, %v416
    %v536 = vpack.c.b16 %v419, %v418
    %v537 = vpack.c.b16 %v421, %v420
    %v538 = vpack.c.b16 %v423, %v422
    %v539 = vpack.c.b16 %v425, %v424
    %v540 = vpack.c.b16 %v427, %v426
    %v541 = vpack.c.b16 %v429, %v428
    %v542 = vpack.c.b16 %v431, %v430
    %v543 = vpack.c.b16 %v433, %v432
    %v544 = vpack.c.b16 %v435, %v434
    %v545 = vpack.c.b16 %v437, %v436
    %v546 = vpack.c.b16 %v439, %v438
    %v547 = vpack.c.b16 %v441, %v440
    %v548 = vpack.c.b16 %v443, %v442
    %v549 = vpack.c.b16 %v445, %v444
    %v550 = vpack.c.b16 %v447, %v446
    %v551 = vpack.c.b16 %v449, %v448
    %v552 = vpack.c.b16 %v451, %v450
    %v553 = vpack.c.b16 %v453, %v452
    %v554 = vpack.c.b16 %v455, %v454
    %v555 = vpack.c.b16 %v457, %v456
    %v556 = vpack.c.b16 %v459, %v458
    %v557 = vpack.c.b16 %v461, %v460
    %v558 = vpack.c.b16 %v463, %v462
    %v559 = vpack.c.b16 %v465, %v464
    %v560 = vpack.c.b16 %v467, %v466
    %v561 = vpack.c.b16 %v469, %v468
    %v562 = vpack.c.b16 %v471, %v470
    %v563 = vpack.c.b16 %v473, %v472
    %v564 = vpack.c.b16 %v475, %v474
    %v565 = vpack.c.b16 %v477, %v476
    %v566 = vpack.c.b16 %v479, %v478
    %v567 = vpack.c.b16 %v481, %v480
    %v568 = vpack.c.b16 %v483, %v482
    %v569 = vpack.c.b16 %v485, %v484
    %v570 = vpack.c.b16 %v487, %v486
    %v571 = vpack.c.b16 %v489, %v488
    %v572 = vpack.c.b16 %v491, %v490
    %v573 = vpack.c.b16 %v493, %v492
    %v574 = vpack.c.b16 %v495, %v494
    %v575 = vpack.c.b16 %v497, %v496
    %v576 = vpack.c.b16 %v499, %v498
    %v577 = vpack.c.b16 %v501, %v500
    %v578 = vpack.c.b16 %v503, %v502
    %v579 = vpack.c.b16 %v505, %v504
    %v580 = vpack.c.b16 %v507, %v506
    %v581 = vpack.c.b16 %v509, %v508
    %v582 = vpack.c.b16 %v511, %v510
    %v583 = vpack.c.b16 %v513, %v512
    %v584 = vpack.c.b16 %v515, %v514
    %v585 = vpack.c.b16 %v517, %v516
    %v586 = vpack.c.b16 %v519, %v518
    %v587 = vpack.c.b16 %v521, %v520
    %v588 = vpack.c.b16 %v523, %v522
    %v589 = vpack.c.b16 %v525, %v524
    %654 = vmatprep.subr.bf16.mxu0 0
    %655 = vmatpush1.bf16.msra.mxu0 %v526
    %656 = vmatprep.subr.bf16.mxu0 0
    %657 = vmatpush1.bf16.msra.mxu0 %v527
    %658 = vmatprep.subr.bf16.mxu0 0
    %659 = vmatpush1.bf16.msra.mxu0 %v528
    %660 = vmatprep.subr.bf16.mxu0 0
    %661 = vmatpush1.bf16.msra.mxu0 %v529
    %662 = vmatprep.subr.bf16.mxu0 0
    %663 = vmatpush1.bf16.msra.mxu0 %v530
    %664 = vmatprep.subr.bf16.mxu0 0
    %665 = vmatpush1.bf16.msra.mxu0 %v531
    %666 = vmatprep.subr.bf16.mxu0 0
    %667 = vmatpush1.bf16.msra.mxu0 %v532
    %668 = vmatprep.subr.bf16.mxu0 0
    %669 = vmatpush1.bf16.msra.mxu0 %v533
    %670 = vmatprep.subr.bf16.mxu0 0
    %671 = vmatpush1.bf16.msra.mxu0 %v534
    %672 = vmatprep.subr.bf16.mxu0 0
    %673 = vmatpush1.bf16.msra.mxu0 %v535
    %674 = vmatprep.subr.bf16.mxu0 0
    %675 = vmatpush1.bf16.msra.mxu0 %v536
    %676 = vmatprep.subr.bf16.mxu0 0
    %677 = vmatpush1.bf16.msra.mxu0 %v537
    %678 = vmatprep.subr.bf16.mxu0 0
    %679 = vmatpush1.bf16.msra.mxu0 %v538
    %680 = vmatprep.subr.bf16.mxu0 0
    %681 = vmatpush1.bf16.msra.mxu0 %v539
    %682 = vmatprep.subr.bf16.mxu0 0
    %683 = vmatpush1.bf16.msra.mxu0 %v540
    %684 = vmatprep.subr.bf16.mxu0 0
    %685 = vmatpush1.bf16.msra.mxu0 %v541
    %686 = vmatprep.mubr.bf16.mxu0 %v128
    %687 = vmatmul.mubr.bf16.gmra.mrb[0].mxu0 %v127
    %v688 = vpop.f32.mrb[0].mxu0
    %v689 = vadd.f32 %v268, %v688
    %v690 = vpop.f32.mrb[0].mxu0
    %v691 = vpop.f32.mrb[0].mxu0
    %v692 = vpop.f32.mrb[0].mxu0
    %693 = vdwg.mxu0
    %694 = vmatprep.subr.bf16.mxu0 0
    %695 = vmatpush1.bf16.msra.mxu0 %v542
    %696 = vmatprep.subr.bf16.mxu0 0
    %697 = vmatpush1.bf16.msra.mxu0 %v543
    %698 = vmatprep.subr.bf16.mxu0 0
    %699 = vmatpush1.bf16.msra.mxu0 %v544
    %700 = vmatprep.subr.bf16.mxu0 0
    %701 = vmatpush1.bf16.msra.mxu0 %v545
    %702 = vmatprep.subr.bf16.mxu0 0
    %703 = vmatpush1.bf16.msra.mxu0 %v546
    %704 = vmatprep.subr.bf16.mxu0 0
    %705 = vmatpush1.bf16.msra.mxu0 %v547
    %706 = vmatprep.subr.bf16.mxu0 0
    %707 = vmatpush1.bf16.msra.mxu0 %v548
    %708 = vmatprep.subr.bf16.mxu0 0
    %709 = vmatpush1.bf16.msra.mxu0 %v549
    %710 = vmatprep.subr.bf16.mxu0 0
    %711 = vmatpush1.bf16.msra.mxu0 %v550
    %712 = vmatprep.subr.bf16.mxu0 0
    %713 = vmatpush1.bf16.msra.mxu0 %v551
    %714 = vmatprep.subr.bf16.mxu0 0
    %715 = vmatpush1.bf16.msra.mxu0 %v552
    %716 = vmatprep.subr.bf16.mxu0 0
    %717 = vmatpush1.bf16.msra.mxu0 %v553
    %718 = vmatprep.subr.bf16.mxu0 0
    %719 = vmatpush1.bf16.msra.mxu0 %v554
    %720 = vmatprep.subr.bf16.mxu0 0
    %721 = vmatpush1.bf16.msra.mxu0 %v555
    %722 = vmatprep.subr.bf16.mxu0 0
    %723 = vmatpush1.bf16.msra.mxu0 %v556
    %724 = vmatprep.subr.bf16.mxu0 0
    %725 = vmatpush1.bf16.msra.mxu0 %v557
    %726 = vmatprep.mubr.bf16.mxu0 %v130
    %727 = vmatmul.mubr.bf16.gmra.mrb[0].mxu0 %v129
    %v728 = vpop.f32.mrb[0].mxu0
    %v729 = vadd.f32 %v689, %v728
    %v730 = vpop.f32.mrb[0].mxu0
    %v731 = vpop.f32.mrb[0].mxu0
    %v732 = vpop.f32.mrb[0].mxu0
    %733 = vdwg.mxu0
    %734 = vmatprep.subr.bf16.mxu0 0
    %735 = vmatpush1.bf16.msra.mxu0 %v558
    %736 = vmatprep.subr.bf16.mxu0 0
    %737 = vmatpush1.bf16.msra.mxu0 %v559
    %738 = vmatprep.subr.bf16.mxu0 0
    %739 = vmatpush1.bf16.msra.mxu0 %v560
    %740 = vmatprep.subr.bf16.mxu0 0
    %741 = vmatpush1.bf16.msra.mxu0 %v561
    %742 = vmatprep.subr.bf16.mxu0 0
    %743 = vmatpush1.bf16.msra.mxu0 %v562
    %744 = vmatprep.subr.bf16.mxu0 0
    %745 = vmatpush1.bf16.msra.mxu0 %v563
    %746 = vmatprep.subr.bf16.mxu0 0
    %747 = vmatpush1.bf16.msra.mxu0 %v564
    %748 = vmatprep.subr.bf16.mxu0 0
    %749 = vmatpush1.bf16.msra.mxu0 %v565
    %750 = vmatprep.subr.bf16.mxu0 0
    %751 = vmatpush1.bf16.msra.mxu0 %v566
    %752 = vmatprep.subr.bf16.mxu0 0
    %753 = vmatpush1.bf16.msra.mxu0 %v567
    %754 = vmatprep.subr.bf16.mxu0 0
    %755 = vmatpush1.bf16.msra.mxu0 %v568
    %756 = vmatprep.subr.bf16.mxu0 0
    %757 = vmatpush1.bf16.msra.mxu0 %v569
    %758 = vmatprep.subr.bf16.mxu0 0
    %759 = vmatpush1.bf16.msra.mxu0 %v570
    %760 = vmatprep.subr.bf16.mxu0 0
    %761 = vmatpush1.bf16.msra.mxu0 %v571
    %762 = vmatprep.subr.bf16.mxu0 0
    %763 = vmatpush1.bf16.msra.mxu0 %v572
    %764 = vmatprep.subr.bf16.mxu0 0
    %765 = vmatpush1.bf16.msra.mxu0 %v573
    %766 = vmatprep.mubr.bf16.mxu0 %v132
    %767 = vmatmul.mubr.bf16.gmra.mrb[0].mxu0 %v131
    %v768 = vpop.f32.mrb[0].mxu0
    %v769 = vadd.f32 %v729, %v768
    %v770 = vpop.f32.mrb[0].mxu0
    %v771 = vpop.f32.mrb[0].mxu0
    %v772 = vpop.f32.mrb[0].mxu0
    %773 = vdwg.mxu0
    %774 = vmatprep.subr.bf16.mxu0 0
    %775 = vmatpush1.bf16.msra.mxu0 %v574
    %776 = vmatprep.subr.bf16.mxu0 0
    %777 = vmatpush1.bf16.msra.mxu0 %v575
    %778 = vmatprep.subr.bf16.mxu0 0
    %779 = vmatpush1.bf16.msra.mxu0 %v576
    %780 = vmatprep.subr.bf16.mxu0 0
    %781 = vmatpush1.bf16.msra.mxu0 %v577
    %782 = vmatprep.subr.bf16.mxu0 0
    %783 = vmatpush1.bf16.msra.mxu0 %v578
    %784 = vmatprep.subr.bf16.mxu0 0
    %785 = vmatpush1.bf16.msra.mxu0 %v579
    %786 = vmatprep.subr.bf16.mxu0 0
    %787 = vmatpush1.bf16.msra.mxu0 %v580
    %788 = vmatprep.subr.bf16.mxu0 0
    %789 = vmatpush1.bf16.msra.mxu0 %v581
    %790 = vmatprep.subr.bf16.mxu0 0
    %791 = vmatpush1.bf16.msra.mxu0 %v582
    %792 = vmatprep.subr.bf16.mxu0 0
    %793 = vmatpush1.bf16.msra.mxu0 %v583
    %794 = vmatprep.subr.bf16.mxu0 0
    %795 = vmatpush1.bf16.msra.mxu0 %v584
    %796 = vmatprep.subr.bf16.mxu0 0
    %797 = vmatpush1.bf16.msra.mxu0 %v585
    %798 = vmatprep.subr.bf16.mxu0 0
    %799 = vmatpush1.bf16.msra.mxu0 %v586
    %800 = vmatprep.subr.bf16.mxu0 0
    %801 = vmatpush1.bf16.msra.mxu0 %v587
    %802 = vmatprep.subr.bf16.mxu0 0
    %803 = vmatpush1.bf16.msra.mxu0 %v588
    %804 = vmatprep.subr.bf16.mxu0 0
    %805 = vmatpush1.bf16.msra.mxu0 %v589
    %806 = vmatprep.mubr.bf16.mxu0 %v134
    %807 = vmatmul.mubr.bf16.gmra.mrb[0].mxu0 %v133
    %v808 = vpop.f32.mrb[0].mxu0
    %v809 = vadd.f32 %v769, %v808
    %v810 = vpop.f32.mrb[0].mxu0
    %v811 = vpop.f32.mrb[0].mxu0
    %v812 = vpop.f32.mrb[0].mxu0
    %813 = vdwg.mxu0
    %v814 = vmax.f32 %v809, 0.0
    %v815 = vpack.c.bf16 %v814, %v814
    %v816 = vld [vmem:[#allocation7] sm:$0xf]
    %v817 = vld [vmem:[#allocation7 + $0x4] sm:$0xf]
    %v818 = vld [vmem:[#allocation7 + $0x8] sm:$0xf]
    %v819 = vld [vmem:[#allocation7 + $0xc] sm:$0xf]
    %v820 = vld [vmem:[#allocation7 + $0x10] sm:$0xf]
    %v821 = vld [vmem:[#allocation7 + $0x14] sm:$0xf]
    %v822 = vld [vmem:[#allocation7 + $0x18] sm:$0xf]
    %v823 = vld [vmem:[#allocation7 + $0x1c] sm:$0xf]
    %v824 = vld [vmem:[#allocation7 + $0x20] sm:$0xf]
    %v825 = vld [vmem:[#allocation7 + $0x24] sm:$0xf]
    %v826 = vld [vmem:[#allocation7 + $0x28] sm:$0xf]
    %v827 = vld [vmem:[#allocation7 + $0x2c] sm:$0xf]
    %v828 = vld [vmem:[#allocation7 + $0x30] sm:$0xf]
    %v829 = vld [vmem:[#allocation7 + $0x34] sm:$0xf]
    %v830 = vld [vmem:[#allocation7 + $0x38] sm:$0xf]
    %v831 = vld [vmem:[#allocation7 + $0x3c] sm:$0xf]
    %v832 = vld [vmem:[%s4] sm:$0x1]
    %v834 = vlaneseq
    %v835 = vshrl.u32 %v834, 7
    %v836 = vsub.s32 0, %v835
    %v837 = vrot.slane %v832, %v836
    %v855 = vunpack.c.l.b16 %v816
    %v856 = vunpack.c.l.b16 %v817
    %v857 = vunpack.c.l.b16 %v818
    %v858 = vunpack.c.l.b16 %v819
    %v859 = vunpack.c.l.b16 %v820
    %v860 = vunpack.c.l.b16 %v821
    %v861 = vunpack.c.l.b16 %v822
    %v862 = vunpack.c.l.b16 %v823
    %v863 = vunpack.c.l.b16 %v824
    %v864 = vunpack.c.l.b16 %v825
    %v865 = vunpack.c.l.b16 %v826
    %v866 = vunpack.c.l.b16 %v827
    %v867 = vunpack.c.l.b16 %v828
    %v868 = vunpack.c.l.b16 %v829
    %v869 = vunpack.c.l.b16 %v830
    %v870 = vunpack.c.l.b16 %v831
    %v871 = vpack.c.b16 %v856, %v855
    %v872 = vpack.c.b16 %v858, %v857
    %v873 = vpack.c.b16 %v860, %v859
    %v874 = vpack.c.b16 %v862, %v861
    %v875 = vpack.c.b16 %v864, %v863
    %v876 = vpack.c.b16 %v866, %v865
    %v877 = vpack.c.b16 %v868, %v867
    %v878 = vpack.c.b16 %v870, %v869
    %887 = vmatprep.subr.bf16.mxu0 0
    %888 = vmatpush1.bf16.msra.mxu0 %v871
    %889 = vmatprep.subr.bf16.mxu0 0
    %890 = vmatpush1.bf16.msra.mxu0 %v872
    %891 = vmatprep.subr.bf16.mxu0 0
    %892 = vmatpush1.bf16.msra.mxu0 %v873
    %893 = vmatprep.subr.bf16.mxu0 0
    %894 = vmatpush1.bf16.msra.mxu0 %v874
    %895 = vmatprep.subr.bf16.mxu0 0
    %896 = vmatpush1.bf16.msra.mxu0 %v875
    %897 = vmatprep.subr.bf16.mxu0 0
    %898 = vmatpush1.bf16.msra.mxu0 %v876
    %899 = vmatprep.subr.bf16.mxu0 0
    %900 = vmatpush1.bf16.msra.mxu0 %v877
    %901 = vmatprep.subr.bf16.mxu0 0
    %902 = vmatpush1.bf16.msra.mxu0 %v878
    %903 = vmatprep.subr.bf16.mxu0 0
    %904 = vmatpush1.bf16.msra.mxu0 0
    %905 = vmatprep.subr.bf16.mxu0 0
    %906 = vmatpush1.bf16.msra.mxu0 0
    %907 = vmatprep.subr.bf16.mxu0 0
    %908 = vmatpush1.bf16.msra.mxu0 0
    %909 = vmatprep.subr.bf16.mxu0 0
    %910 = vmatpush1.bf16.msra.mxu0 0
    %911 = vmatprep.subr.bf16.mxu0 0
    %912 = vmatpush1.bf16.msra.mxu0 0
    %913 = vmatprep.subr.bf16.mxu0 0
    %914 = vmatpush1.bf16.msra.mxu0 0
    %915 = vmatprep.subr.bf16.mxu0 0
    %916 = vmatpush1.bf16.msra.mxu0 0
    %917 = vmatprep.subr.bf16.mxu0 0
    %918 = vmatpush1.bf16.msra.mxu0 0
    %919 = vmatprep.mubr.bf16.mxu0 0
    %920 = vmatmul.mubr.bf16.gmra.mrb[0].mxu0 %v815
    %v921 = vpop.f32.mrb[0].mxu0
    %v922 = vadd.f32 %v837, %v921
    %v923 = vpop.f32.mrb[0].mxu0
    %v924 = vpop.f32.mrb[0].mxu0
    %v925 = vpop.f32.mrb[0].mxu0
    %926 = vdwg.mxu0
    %v927 = vmax.f32 %v922, 0.0
    %v928 = vpack.c.bf16 %v927, %v927
    %v929 = vld [vmem:[#allocation8] sm:$0xf]
    %v930 = vld [vmem:[#allocation8 + $0x4] sm:$0xf]
    %v931 = vld [vmem:[#allocation8 + $0x8] sm:$0xf]
    %v932 = vld [vmem:[#allocation8 + $0xc] sm:$0xf]
    %v933 = vld [vmem:[#allocation8 + $0x10] sm:$0xf]
    %v934 = vld [vmem:[#allocation8 + $0x14] sm:$0xf]
    %v935 = vld [vmem:[#allocation8 + $0x18] sm:$0xf]
    %v936 = vld [vmem:[#allocation8 + $0x1c] sm:$0xf]
    %v937 = vld [vmem:[#allocation8 + $0x20] sm:$0xf]
    %v938 = vld [vmem:[#allocation8 + $0x24] sm:$0xf]
    %v939 = vld [vmem:[#allocation8 + $0x28] sm:$0xf]
    %v940 = vld [vmem:[#allocation8 + $0x2c] sm:$0xf]
    %v941 = vld [vmem:[#allocation8 + $0x30] sm:$0xf]
    %v942 = vld [vmem:[#allocation8 + $0x34] sm:$0xf]
    %v943 = vld [vmem:[#allocation8 + $0x38] sm:$0xf]
    %v944 = vld [vmem:[#allocation8 + $0x3c] sm:$0xf]
    %v945 = vld [vmem:[%s6] sm:$0x1]
    %v947 = vlaneseq
    %v948 = vshrl.u32 %v947, 7
    %v949 = vsub.s32 0, %v948
    %v950 = vrot.slane %v945, %v949
    %v968 = vunpack.c.l.b16 %v929
    %v969 = vunpack.c.l.b16 %v930
    %v970 = vunpack.c.l.b16 %v931
    %v971 = vunpack.c.l.b16 %v932
    %v972 = vunpack.c.l.b16 %v933
    %v973 = vunpack.c.l.b16 %v934
    %v974 = vunpack.c.l.b16 %v935
    %v975 = vunpack.c.l.b16 %v936
    %v976 = vunpack.c.l.b16 %v937
    %v977 = vunpack.c.l.b16 %v938
    %v978 = vunpack.c.l.b16 %v939
    %v979 = vunpack.c.l.b16 %v940
    %v980 = vunpack.c.l.b16 %v941
    %v981 = vunpack.c.l.b16 %v942
    %v982 = vunpack.c.l.b16 %v943
    %v983 = vunpack.c.l.b16 %v944
    %v984 = vpack.c.b16 %v969, %v968
    %v985 = vpack.c.b16 %v971, %v970
    %v986 = vpack.c.b16 %v973, %v972
    %v987 = vpack.c.b16 %v975, %v974
    %v988 = vpack.c.b16 %v977, %v976
    %v989 = vpack.c.b16 %v979, %v978
    %v990 = vpack.c.b16 %v981, %v980
    %v991 = vpack.c.b16 %v983, %v982
    %1000 = vmatprep.subr.bf16.mxu0 0
    %1001 = vmatpush1.bf16.msra.mxu0 %v984
    %1002 = vmatprep.subr.bf16.mxu0 0
    %1003 = vmatpush1.bf16.msra.mxu0 %v985
    %1004 = vmatprep.subr.bf16.mxu0 0
    %1005 = vmatpush1.bf16.msra.mxu0 %v986
    %1006 = vmatprep.subr.bf16.mxu0 0
    %1007 = vmatpush1.bf16.msra.mxu0 %v987
    %1008 = vmatprep.subr.bf16.mxu0 0
    %1009 = vmatpush1.bf16.msra.mxu0 %v988
    %1010 = vmatprep.subr.bf16.mxu0 0
    %1011 = vmatpush1.bf16.msra.mxu0 %v989
    %1012 = vmatprep.subr.bf16.mxu0 0
    %1013 = vmatpush1.bf16.msra.mxu0 %v990
    %1014 = vmatprep.subr.bf16.mxu0 0
    %1015 = vmatpush1.bf16.msra.mxu0 %v991
    %1016 = vmatprep.subr.bf16.mxu0 0
    %1017 = vmatpush1.bf16.msra.mxu0 0
    %1018 = vmatprep.subr.bf16.mxu0 0
    %1019 = vmatpush1.bf16.msra.mxu0 0
    %1020 = vmatprep.subr.bf16.mxu0 0
    %1021 = vmatpush1.bf16.msra.mxu0 0
    %1022 = vmatprep.subr.bf16.mxu0 0
    %1023 = vmatpush1.bf16.msra.mxu0 0
    %1024 = vmatprep.subr.bf16.mxu0 0
    %1025 = vmatpush1.bf16.msra.mxu0 0
    %1026 = vmatprep.subr.bf16.mxu0 0
    %1027 = vmatpush1.bf16.msra.mxu0 0
    %1028 = vmatprep.subr.bf16.mxu0 0
    %1029 = vmatpush1.bf16.msra.mxu0 0
    %1030 = vmatprep.subr.bf16.mxu0 0
    %1031 = vmatpush1.bf16.msra.mxu0 0
    %1032 = vmatprep.mubr.bf16.mxu0 0
    %1033 = vmatmul.mubr.bf16.gmra.mrb[0].mxu0 %v928
    %v1034 = vpop.f32.mrb[0].mxu0
    %v1035 = vadd.f32 %v950, %v1034
    %v1036 = vpop.f32.mrb[0].mxu0
    %v1037 = vpop.f32.mrb[0].mxu0
    %v1038 = vpop.f32.mrb[0].mxu0
    %1039 = vdwg.mxu0
    %1040 = vst [vmem:[#allocation10] sm:$0x3] %v1035
    // Predicated region
    $region46: #{tpu_custom_call.1} parent=1 // pred_check
      _
    $region47: #{tpu_custom_call.1} parent=1 // pred_check_branch
      %1042 = sbr.rel (0) target = $region49
    $region48: #{tpu_custom_call.1} parent=1 // pred_region
      %s1044 = ssub.s32 32, 32
      %1045 = vsyncadd [#allocation4], %s1044
      %s1047 = sshll.u32 [#allocation10], 4
      %s1048 = int_to_ptr.vmem [resolvable:$true] %s1047
      %1050 = dma.vmem_to_hbm [thread:$0]  %s1048, 32, %s7, [#allocation4]
    $region49: #{tpu_custom_call.1} parent=1 // pred_fallthru
      _
    // Predicated region
    $region50: #{tpu_custom_call.1} parent=1 // pred_check
      _
    $region51: #{tpu_custom_call.1} parent=1 // pred_check_branch
      %1052 = sbr.rel (0) target = $region53
    $region52: #{tpu_custom_call.1} parent=1 // pred_region
      %1053 = dma.done [#allocation4], 32
    $region53: #{tpu_custom_call.1} parent=1 // pred_fallthru
      _
    %1054 = vsyncpa [#allocation3], 1
    %1055 = vsyncpa [#allocation6], 1
    %1056 = vsyncpa [#allocation9], 1
    %1057 = vsyncpa [#allocation4], 1

</llo_original>
